<compile_context>
chip_gen: v7x
topology: tpu7x:2x2x1
jax: 0.10.0
libtpu: 0.0.40
codegen_flags: <defaults>
</compile_context>

<pallas_src>
import jax
import jax.numpy as jnp
from jax.experimental import pallas as pl
from jax.experimental.pallas import tpu as pltpu

_LANE = 128
_SUBLANE = {4: 8, 2: 16, 1: 32}  # min sublane multiple by itemsize


def _serelu_kernel(x_ref, o_ref):
    x = x_ref[...]
    # Scalar constants: no materialized zeros_like/ones_like broadcasts.
    o_ref[...] = jnp.maximum(x, 0) * jnp.maximum(1 - x, 0)


def serelu(x: jax.Array, *, tile_rows: int = 2048) -> jax.Array:
    """relu(x) * relu(1 - x) elementwise via a Pallas TPU kernel.

    Accepts any shape / float dtype; matches PyTorch SeReLU.forward.
    """
    orig_shape = x.shape
    dtype = x.dtype
    n = x.size
    itemsize = jnp.dtype(dtype).itemsize
    sublane = _SUBLANE.get(itemsize, 8)
    align = sublane * _LANE  # minimal pad granularity (e.g. 1024 elems for f32)

    # Pad only to the minimal (sublane, lane) tile granularity, and only when
    # actually misaligned: the concatenate + output slice each cost a full
    # extra HBM pass, which roughly halves throughput of a mem-bound op.
    pad = (-n) % align
    x_flat = jnp.ravel(x)
    if pad:
        x_flat = jnp.concatenate([x_flat, jnp.zeros((pad,), dtype=dtype)])
    rows = (n + pad) // _LANE
    x2d = x_flat.reshape(rows, _LANE)

    # Clamp tile size: multiple of the sublane count, no larger than the array.
    tr = min(tile_rows, rows)
    tr = max(sublane, (tr // sublane) * sublane)
    assert tr % sublane == 0, "tile rows must be a multiple of the sublane count"
    grid = (pl.cdiv(rows, tr),)

    out2d = pl.pallas_call(
        _serelu_kernel,
        out_shape=jax.ShapeDtypeStruct((rows, _LANE), dtype),
        grid_spec=pltpu.PrefetchScalarGridSpec(
            num_scalar_prefetch=0,
            grid=grid,
            in_specs=[pl.BlockSpec((tr, _LANE), lambda i: (i, 0))],
            out_specs=pl.BlockSpec((tr, _LANE), lambda i: (i, 0)),
        ),
        compiler_params=pltpu.CompilerParams(
            dimension_semantics=("parallel",),
        ),
        cost_estimate=pl.CostEstimate(
            flops=4 * n,
            transcendentals=0,
            bytes_accessed=2 * n * itemsize,
        ),
    )(x2d)

    out_flat = out2d.reshape(-1)
    if pad:
        out_flat = out_flat[:n]
    return out_flat.reshape(orig_shape)


def serelu_ref(x: jax.Array) -> jax.Array:
    return jnp.maximum(x, 0.0) * jnp.maximum(1.0 - x, 0.0)


if __name__ == "__main__":
    key = jax.random.PRNGKey(0)

    # NCHW input, matching typical PyTorch conv-style activation shapes
    # (aligned fast path: no padding).
    x = jax.random.normal(key, (2, 4, 16, 16), dtype=jnp.float32)
    y = serelu(x)
    jax.block_until_ready(y)
    y_ref = serelu_ref(x)
    assert y.shape == x.shape and y.dtype == x.dtype
    assert jnp.allclose(y, y_ref, atol=1e-6, rtol=1e-6)

    # Misaligned shape: exercises the pad + slice path and partial blocks.
    x2 = jax.random.normal(jax.random.PRNGKey(1), (3, 5, 7), dtype=jnp.float32)
    y2 = serelu(x2)
    jax.block_until_ready(y2)
    assert y2.shape == x2.shape and y2.dtype == x2.dtype
    assert jnp.allclose(y2, serelu_ref(x2), atol=1e-6, rtol=1e-6)

    print("KERNEL_OK")
</pallas_src>

<mosaic_0001>
module attributes {stable_mosaic.version = 11 : i64} {
  func.func @_serelu_kernel(%arg0: i32, %arg1: memref<16x128xf32, #tpu.memory_space<vmem>>, %arg2: memref<16x128xf32, #tpu.memory_space<vmem>>) attributes {dimension_semantics = [#tpu.dimension_semantics<parallel>], iteration_bounds = array<i64: 1>, scalar_prefetch = 0 : i64, scratch_operands = 0 : i64, tpu.core_type = #tpu.core_type<tc>, window_params = [{transform_indices = @transform_0, window_bounds = array<i64: 16, 128>}, {transform_indices = @transform_1, window_bounds = array<i64: 16, 128>}]} {
    %c0 = arith.constant 0 : index
    %c0_0 = arith.constant 0 : index
    %0 = vector.load %arg1[%c0, %c0_0] : memref<16x128xf32, #tpu.memory_space<vmem>>, vector<16x128xf32>
    %cst = arith.constant 0.000000e+00 : f32
    %1 = vector.broadcast %cst : f32 to vector<16x128xf32>
    %2 = arith.maximumf %0, %1 : vector<16x128xf32>
    %cst_1 = arith.constant 1.000000e+00 : f32
    %3 = vector.broadcast %cst_1 : f32 to vector<16x128xf32>
    %4 = arith.subf %3, %0 : vector<16x128xf32>
    %cst_2 = arith.constant 0.000000e+00 : f32
    %5 = vector.broadcast %cst_2 : f32 to vector<16x128xf32>
    %6 = arith.maximumf %4, %5 : vector<16x128xf32>
    %7 = arith.mulf %2, %6 : vector<16x128xf32>
    %c0_3 = arith.constant 0 : index
    %c0_4 = arith.constant 0 : index
    %8 = vector.load %arg2[%c0_3, %c0_4] : memref<16x128xf32, #tpu.memory_space<vmem>>, vector<16x128xf32>
    tpu.vector_store %arg2[%c0_3, %c0_4], %7 {strides = array<i32>} : memref<16x128xf32, #tpu.memory_space<vmem>>, vector<16x128xf32>,
    return
  }
  func.func @transform_0(%arg0: i32) -> (i32, i32) {
    %c0_i32 = arith.constant 0 : i32
    %c0_i32_0 = arith.constant 0 : i32
    return %arg0, %c0_i32 : i32, i32
  }
  func.func @transform_1(%arg0: i32) -> (i32, i32) {
    %c0_i32 = arith.constant 0 : i32
    %c0_i32_0 = arith.constant 0 : i32
    return %arg0, %c0_i32 : i32, i32
  }
}

</mosaic_0001>

<llo_original>
// kernel: tpu_custom_call.1
$region0: #{tpu_custom_call.1}
  #allocation0 [shape = 'u32[]', space=smem, size = 0x4, offset = 0x4, fixed_abs, tag = 'smem constant byte address 0x4 - core index']
  #allocation1 [shape = 'u32[144,128]{1,0:T(1,128)}', space=vmem, size = 0x12000, scoped, tag = 'internal scratch']
  %s0 = inlined_call_operand.hbm [shape: f32[16,128], index: 0, kind: input, shape index: {}]
  %s1 = inlined_call_operand.hbm [shape: f32[16,128], index: 1, kind: output, shape index: {}]
  %s2 = sld [smem:[#allocation0]]
  $region18: #{tpu_custom_call.1} parent=0
    _
  %s4 = ssub.s32 1, %s2
  %s5 = scalar_select 0, %s4, %s2
  $region1: #{tpu_custom_call.1} parent=0
    #allocation2 [shape = 'u8[8192]{0}', space=vmem, size = 0x2000, scoped, tag = 'input window, operand 0, single buffered']
    #allocation3 [shape = 's32[1]{0}', space=sflag, size = 0x4, scoped, tag = 'scoped memory for tpu_custom_call.1']
    #allocation4 [shape = 's32[1]{0}', space=sflag, size = 0x4, scoped, tag = 'scoped memory for tpu_custom_call.1']
    #allocation5 [shape = 'u8[8192]{0}', space=vmem, size = 0x2000, scoped, tag = 'output window, operand 0, single buffered']
    %6 = vsyncpa [#allocation3], 0
    %7 = vsyncpa [#allocation4], 0
    // Predicated region
    $region2: #{tpu_custom_call.1} parent=1 // pred_check
      _
    $region3: #{tpu_custom_call.1} parent=1 // pred_check_branch
      %9 = sbr.rel (0) target = $region5
    $region4: #{tpu_custom_call.1} parent=1 // pred_region
      %s11 = ssub.s32 256, 256
      %12 = vsyncadd [#allocation3], %s11
      %s13 = sshll.u32 [#allocation2], 4
      %s14 = int_to_ptr.vmem [resolvable:$true] %s13
      %19 = dma.hbm_to_vmem [thread:$0]  %s0, 256, %s14, [#allocation3], 128, 128, 8
    $region5: #{tpu_custom_call.1} parent=1 // pred_fallthru
      _
    // Predicated region
    $region6: #{tpu_custom_call.1} parent=1 // pred_check
      _
    $region7: #{tpu_custom_call.1} parent=1 // pred_check_branch
      %21 = sbr.rel (0) target = $region9
    $region8: #{tpu_custom_call.1} parent=1 // pred_region
      %22 = dma.done [#allocation3], 256
    $region9: #{tpu_custom_call.1} parent=1 // pred_fallthru
      _
    %v23 = vld [vmem:[#allocation2] sm:$0xff]
    %v24 = vld [vmem:[#allocation2 + $0x8] sm:$0xff]
    %v25 = vmax.f32 %v23, 0.0
    %v26 = vmax.f32 %v24, 0.0
    %v27 = vsub.f32 1.0, %v23
    %v28 = vsub.f32 1.0, %v24
    %v29 = vmax.f32 %v27, 0.0
    %v30 = vmax.f32 %v28, 0.0
    %v31 = vmul.f32 %v25, %v29
    %v32 = vmul.f32 %v26, %v30
    %33 = vst [vmem:[#allocation5] sm:$0xff] %v31
    %34 = vst [vmem:[#allocation5 + $0x8] sm:$0xff] %v32
    // Predicated region
    $region10: #{tpu_custom_call.1} parent=1 // pred_check
      _
    $region11: #{tpu_custom_call.1} parent=1 // pred_check_branch
      %36 = sbr.rel (0) target = $region13
    $region12: #{tpu_custom_call.1} parent=1 // pred_region
      %s38 = ssub.s32 256, 256
      %39 = vsyncadd [#allocation4], %s38
      %s40 = sshll.u32 [#allocation5], 4
      %s41 = int_to_ptr.vmem [resolvable:$true] %s40
      %46 = dma.vmem_to_hbm [thread:$0]  %s41, 256, %s1, [#allocation4], 128, 128, 8
    $region13: #{tpu_custom_call.1} parent=1 // pred_fallthru
      _
    // Predicated region
    $region14: #{tpu_custom_call.1} parent=1 // pred_check
      _
    $region15: #{tpu_custom_call.1} parent=1 // pred_check_branch
      %48 = sbr.rel (0) target = $region17
    $region16: #{tpu_custom_call.1} parent=1 // pred_region
      %49 = dma.done [#allocation4], 256
    $region17: #{tpu_custom_call.1} parent=1 // pred_fallthru
      _
    %50 = vsyncpa [#allocation3], 1
    %51 = vsyncpa [#allocation4], 1

</llo_original>
